<compile_context>
chip_gen: v7x
topology: tpu7x:2x2x1
jax: 0.10.0
libtpu: 0.0.40
codegen_flags: <defaults>
</compile_context>

<pallas_src>
import jax
import jax.numpy as jnp
from jax.experimental import pallas as pl
from jax.experimental.pallas import tpu as pltpu

_MIB = 1024 * 1024


def _round_up(n, m):
    return ((n + m - 1) // m) * m


def _vmem_capacity_bytes():
    """Physical VMEM per TensorCore; conservative 64 MiB fallback (safe on v7x)."""
    try:
        return int(pltpu.get_tpu_info().vmem_capacity_bytes)
    except Exception:
        return 64 * _MIB


def _pad_cast(a, shape, dtype):
    """Zero-pad `a` to `shape` / cast to `dtype`, skipping copies when possible."""
    if a.shape != tuple(shape):
        out = jnp.zeros(shape, dtype)
        return out.at[tuple(slice(0, s) for s in a.shape)].set(a.astype(dtype))
    if a.dtype != dtype:
        return a.astype(dtype)
    return a


def _choose_block_b(B, requested):
    """Pick the batch tile: big for arithmetic intensity, minimal padding waste,
    and >= 2 tiles when the batch is large enough (v7x megacore)."""
    B16 = _round_up(max(B, 1), 16)
    requested = max(16, _round_up(requested, 16))
    if B16 <= requested:
        if B16 >= 512:                       # split so both v7x TensorCores get work
            return _round_up((B16 + 1) // 2, 16)
        return B16
    # Several tiles: among 128-multiples in [requested/2, requested], minimize waste.
    best, best_waste = requested, _round_up(B16, requested) - B16
    cand = (requested // 128) * 128
    lo = max(128, requested // 2)
    while cand >= lo:
        waste = _round_up(B16, cand) - B16
        if waste < best_waste:
            best, best_waste = cand, waste
        cand -= 128
    return best


def mlp_kernel(x_ref, w1_ref, b1_ref, w2_ref, b2_ref, o_ref):
    """out = relu(x @ W1 + b1) @ W2 + b2, reduced over hidden-dim chunks (grid axis 1).

    The output block index is k-invariant, so o_ref stays VMEM-resident across the
    reduction and doubles as the f32 accumulator (no scratch, no finalize copy).
    """
    k = pl.program_id(1)

    @pl.when(k == 0)
    def _init():
        o_ref[...] = jnp.zeros_like(o_ref)

    # First matmul: bf16 operands on the MXU, f32 accumulation; bias + ReLU in f32.
    h = jnp.dot(x_ref[...], w1_ref[...],
                preferred_element_type=jnp.float32) + b1_ref[...]
    h = jnp.maximum(h, 0.0)

    # Second matmul: this hidden chunk's contribution, accumulated in f32.
    o_ref[...] += jnp.dot(h.astype(jnp.bfloat16), w2_ref[...],
                          preferred_element_type=jnp.float32)

    @pl.when(k == pl.num_programs(1) - 1)
    def _finalize():
        o_ref[...] += b2_ref[...]


def mlp_forward(x, w1, b1, w2, b2, *, block_b=None, block_h=None):
    """x: (B, D_in); w1: (D_in, H); b1: (1, H) or (H,); w2: (H, D_out); b2: (1, D_out) or (D_out,).

    Weights are stored (in_dim, out_dim), i.e. transposed from nn.Linear's (out, in),
    so the kernel computes y = x @ W + b directly.
    """
    B, D_in = x.shape
    H = w1.shape[1]
    D_out = w2.shape[1]
    b1 = jnp.reshape(b1, (1, H))
    b2 = jnp.reshape(b2, (1, D_out))

    # Lane / MXU alignment: pad all contraction and output dims to 128.
    D_in_p = _round_up(D_in, 128)
    H_p = _round_up(H, 128)
    D_out_p = _round_up(D_out, 128)

    # Generation-aware VMEM budget (~85% of physical: ~109 MiB v5e/v6e, ~54 MiB v7x).
    vmem_cap = int(0.85 * _vmem_capacity_bytes())
    big_vmem = vmem_cap >= 96 * _MIB

    # block_b is the arithmetic-intensity knob: weight bytes/flop ~ 1/block_b.
    if block_b is None:
        block_b = 1024 if big_vmem else 512
    if block_h is None:
        # Weights-resident fast path: if both weight matrices fit comfortably in
        # VMEM, collapse the reduction grid to one step so W1/W2 are DMA'd once
        # for the whole kernel instead of once per batch tile.
        weight_bytes = (D_in_p * H_p + H_p * D_out_p) * 2 + (H_p + D_out_p) * 4
        if weight_bytes <= vmem_cap // 2:
            block_h = H_p
        else:
            block_h = 1024 if big_vmem else 512

    block_b = _choose_block_b(B, block_b)
    block_h = min(_round_up(block_h, 128), H_p)

    def vmem_est(bb, bh):
        # Double-buffered I/O tiles + hidden intermediate (f32 + bf16 copy).
        return (2 * bb * D_in_p * 2        # x tiles (bf16)
                + 2 * D_in_p * bh * 2      # W1 chunks (bf16)
                + 2 * bh * 4               # b1 chunks (f32)
                + 2 * bh * D_out_p * 2     # W2 chunks (bf16)
                + 2 * D_out_p * 4          # b2 (f32)
                + 2 * bb * D_out_p * 4     # output / accumulator tiles (f32)
                + bb * bh * 6)             # hidden intermediate (f32 + bf16 cast)

    # Shrink tiles until they fit the budget (keep ~4 MiB headroom for Mosaic scratch).
    budget = vmem_cap - 4 * _MIB
    while vmem_est(block_b, block_h) > budget and block_h > 128:
        block_h = max(128, _round_up(block_h // 2, 128))
    while vmem_est(block_b, block_h) > budget and block_b > 16:
        block_b = max(16, _round_up(block_b // 2, 16))

    B_p = _round_up(B, block_b)

    # Pad + cast operands only when needed (skip copies for already-aligned data).
    # TODO(synk): for a serving path, pre-pad/cast the weights once at init time.
    xp = _pad_cast(x, (B_p, D_in_p), jnp.bfloat16)
    w1p = _pad_cast(w1, (D_in_p, H_p), jnp.bfloat16)
    b1p = _pad_cast(b1, (1, H_p), jnp.float32)
    w2p = _pad_cast(w2, (H_p, D_out_p), jnp.bfloat16)
    b2p = _pad_cast(b2, (1, D_out_p), jnp.float32)

    grid = (B_p // block_b, H_p // block_h)

    vmem_limit = int(min(vmem_cap,
                         max(vmem_est(block_b, block_h) + 4 * _MIB, 32 * _MIB)))

    flops = 2 * B_p * H_p * (D_in_p + D_out_p)
    bytes_accessed = int(xp.size * 2 + w1p.size * 2 + w2p.size * 2
                         + b1p.size * 4 + b2p.size * 4 + B_p * D_out_p * 4)

    out = pl.pallas_call(
        mlp_kernel,
        out_shape=jax.ShapeDtypeStruct((B_p, D_out_p), jnp.float32),
        grid_spec=pltpu.PrefetchScalarGridSpec(
            num_scalar_prefetch=0,
            grid=grid,
            in_specs=[
                pl.BlockSpec((block_b, D_in_p), lambda i, k: (i, 0)),   # x batch tile
                pl.BlockSpec((D_in_p, block_h), lambda i, k: (0, k)),   # W1 hidden chunk
                pl.BlockSpec((1, block_h), lambda i, k: (0, k)),        # b1 hidden chunk
                pl.BlockSpec((block_h, D_out_p), lambda i, k: (k, 0)),  # W2 hidden chunk
                pl.BlockSpec((1, D_out_p), lambda i, k: (0, 0)),        # b2 (grid-invariant)
            ],
            out_specs=pl.BlockSpec((block_b, D_out_p), lambda i, k: (i, 0)),
        ),
        compiler_params=pltpu.CompilerParams(
            dimension_semantics=("parallel", "arbitrary"),
            vmem_limit_bytes=vmem_limit,
        ),
        cost_estimate=pl.CostEstimate(flops=flops, transcendentals=0,
                                      bytes_accessed=bytes_accessed),
    )(xp, w1p, b1p, w2p, b2p)

    if B_p == B and D_out_p == D_out:
        return out
    return out[:B, :D_out]


def init_params(key, input_dim, hidden_dim, output_dim):
    """Deterministic init mimicking nn.Linear's U(-1/sqrt(fan_in), 1/sqrt(fan_in))."""
    k1, k2, k3, k4 = jax.random.split(key, 4)
    lim1 = 1.0 / jnp.sqrt(input_dim)
    lim2 = 1.0 / jnp.sqrt(hidden_dim)
    w1 = jax.random.uniform(k1, (input_dim, hidden_dim), jnp.float32, -lim1, lim1)
    b1 = jax.random.uniform(k2, (1, hidden_dim), jnp.float32, -lim1, lim1)
    w2 = jax.random.uniform(k3, (hidden_dim, output_dim), jnp.float32, -lim2, lim2)
    b2 = jax.random.uniform(k4, (1, output_dim), jnp.float32, -lim2, lim2)
    return w1, b1, w2, b2


def _ref_f32(x, w1, b1, w2, b2):
    return jnp.maximum(x @ w1 + b1, 0.0) @ w2 + b2


def _ref_bf16(x, w1, b1, w2, b2):
    # Mirrors the kernel's bf16-operand / f32-accumulation numerics.
    xb = x.astype(jnp.bfloat16).astype(jnp.float32)
    w1b = w1.astype(jnp.bfloat16).astype(jnp.float32)
    w2b = w2.astype(jnp.bfloat16).astype(jnp.float32)
    h = jnp.maximum(xb @ w1b + b1, 0.0)
    hb = h.astype(jnp.bfloat16).astype(jnp.float32)
    return hb @ w2b + b2


if __name__ == "__main__":
    key = jax.random.PRNGKey(0)
    k_x, k_p, k_x2, k_p2 = jax.random.split(key, 4)

    # Small demo shapes consistent with the module's forward (B, input_dim).
    B, input_dim, hidden_dim, output_dim = 8, 16, 32, 8
    x = jax.random.normal(k_x, (B, input_dim), jnp.float32)
    w1, b1, w2, b2 = init_params(k_p, input_dim, hidden_dim, output_dim)

    out = jax.block_until_ready(mlp_forward(x, w1, b1, w2, b2))
    assert out.shape == (B, output_dim)
    assert jnp.allclose(out, _ref_bf16(x, w1, b1, w2, b2), atol=2e-2, rtol=2e-2)
    assert jnp.allclose(out, _ref_f32(x, w1, b1, w2, b2), atol=5e-2, rtol=5e-2)

    # Second check exercising a multi-step grid:
    #   batch-tile waste minimizer (B=384 -> block_b=128, 3 tiles, zero padding)
    #   and an explicit block_h=512 -> 2 hidden-reduction chunks.
    B2, in2, hid2, out2 = 384, 128, 1024, 64
    x2 = jax.random.normal(k_x2, (B2, in2), jnp.float32)
    w1b_, b1b_, w2b_, b2b_ = init_params(k_p2, in2, hid2, out2)
    y2 = jax.block_until_ready(
        mlp_forward(x2, w1b_, b1b_, w2b_, b2b_, block_b=256, block_h=512))
    assert y2.shape == (B2, out2)
    assert jnp.allclose(y2, _ref_bf16(x2, w1b_, b1b_, w2b_, b2b_),
                        atol=3e-2, rtol=3e-2)

    # Third check: default (auto) tiling hits the weights-resident fast path.
    y3 = jax.block_until_ready(mlp_forward(x2, w1b_, b1b_, w2b_, b2b_))
    assert y3.shape == (B2, out2)
    assert jnp.allclose(y3, _ref_bf16(x2, w1b_, b1b_, w2b_, b2b_),
                        atol=3e-2, rtol=3e-2)

    print("KERNEL_OK")
</pallas_src>

<mosaic_0001>
module attributes {stable_mosaic.version = 11 : i64} {
  func.func @mlp_kernel(%arg0: i32, %arg1: i32, %arg2: memref<16x128xbf16, #tpu.memory_space<vmem>>, %arg3: memref<128x128xbf16, #tpu.memory_space<vmem>>, %arg4: memref<1x128xf32, #tpu.memory_space<vmem>>, %arg5: memref<128x128xbf16, #tpu.memory_space<vmem>>, %arg6: memref<1x128xf32, #tpu.memory_space<vmem>>, %arg7: memref<16x128xf32, #tpu.memory_space<vmem>>) attributes {dimension_semantics = [#tpu.dimension_semantics<parallel>, #tpu.dimension_semantics<arbitrary>], iteration_bounds = array<i64: 1, 1>, scalar_prefetch = 0 : i64, scratch_operands = 0 : i64, tpu.core_type = #tpu.core_type<tc>, window_params = [{transform_indices = @transform_0, window_bounds = array<i64: 16, 128>}, {transform_indices = @transform_1, window_bounds = array<i64: 128, 128>}, {transform_indices = @transform_2, window_bounds = array<i64: 1, 128>}, {transform_indices = @transform_3, window_bounds = array<i64: 128, 128>}, {pipeline_mode = #tpu.pipeline_mode<synchronous>, transform_indices = @transform_4, window_bounds = array<i64: 1, 128>}, {transform_indices = @transform_5, window_bounds = array<i64: 16, 128>}]} {
    %c0_i32 = arith.constant 0 : i32
    %0 = arith.cmpi eq, %arg1, %c0_i32 : i32
    %1 = arith.extui %0 : i1 to i32
    %c0_i32_0 = arith.constant 0 : i32
    %2 = arith.cmpi ne, %1, %c0_i32_0 : i32
    scf.if %2 {
      %cst_16 = arith.constant 0.000000e+00 : f32
      %20 = vector.broadcast %cst_16 : f32 to vector<16x128xf32>
      %c0_17 = arith.constant 0 : index
      %c0_18 = arith.constant 0 : index
      %21 = vector.load %arg7[%c0_17, %c0_18] : memref<16x128xf32, #tpu.memory_space<vmem>>, vector<16x128xf32>
      tpu.vector_store %arg7[%c0_17, %c0_18], %20 {strides = array<i32>} : memref<16x128xf32, #tpu.memory_space<vmem>>, vector<16x128xf32>,
    } else {
    }
    %c0 = arith.constant 0 : index
    %c0_1 = arith.constant 0 : index
    %3 = vector.load %arg2[%c0, %c0_1] : memref<16x128xbf16, #tpu.memory_space<vmem>>, vector<16x128xbf16>
    %c0_2 = arith.constant 0 : index
    %c0_3 = arith.constant 0 : index
    %4 = vector.load %arg3[%c0_2, %c0_3] : memref<128x128xbf16, #tpu.memory_space<vmem>>, vector<128x128xbf16>
    %cst = arith.constant dense<0.000000e+00> : vector<16x128xf32>
    %5 = tpu.matmul %3, %4, %cst {dimension_numbers = #tpu.dot_dimension_numbers<[1], [0], [0], [1], [0, 0, 1, 1], [], []>} : vector<16x128xbf16>, vector<128x128xbf16>, vector<16x128xf32> -> vector<16x128xf32>
    %c0_4 = arith.constant 0 : index
    %c0_5 = arith.constant 0 : index
    %6 = vector.load %arg4[%c0_4, %c0_5] : memref<1x128xf32, #tpu.memory_space<vmem>>, vector<1x128xf32>
    %7 = vector.broadcast %6 : vector<1x128xf32> to vector<16x128xf32>
    %8 = arith.addf %5, %7 : vector<16x128xf32>
    %cst_6 = arith.constant 0.000000e+00 : f32
    %9 = vector.broadcast %cst_6 : f32 to vector<16x128xf32>
    %10 = arith.maximumf %8, %9 : vector<16x128xf32>
    %c0_7 = arith.constant 0 : index
    %c0_8 = arith.constant 0 : index
    %11 = vector.load %arg7[%c0_7, %c0_8] : memref<16x128xf32, #tpu.memory_space<vmem>>, vector<16x128xf32>
    %12 = arith.truncf %10 : vector<16x128xf32> to vector<16x128xbf16>
    %c0_9 = arith.constant 0 : index
    %c0_10 = arith.constant 0 : index
    %13 = vector.load %arg5[%c0_9, %c0_10] : memref<128x128xbf16, #tpu.memory_space<vmem>>, vector<128x128xbf16>
    %cst_11 = arith.constant dense<0.000000e+00> : vector<16x128xf32>
    %14 = tpu.matmul %12, %13, %cst_11 {dimension_numbers = #tpu.dot_dimension_numbers<[1], [0], [0], [1], [0, 0, 1, 1], [], []>} : vector<16x128xbf16>, vector<128x128xbf16>, vector<16x128xf32> -> vector<16x128xf32>
    %15 = arith.addf %11, %14 : vector<16x128xf32>
    %c0_12 = arith.constant 0 : index
    %c0_13 = arith.constant 0 : index
    %16 = vector.load %arg7[%c0_12, %c0_13] : memref<16x128xf32, #tpu.memory_space<vmem>>, vector<16x128xf32>
    tpu.vector_store %arg7[%c0_12, %c0_13], %15 {strides = array<i32>} : memref<16x128xf32, #tpu.memory_space<vmem>>, vector<16x128xf32>,
    %c0_i32_14 = arith.constant 0 : i32
    %17 = arith.cmpi eq, %arg1, %c0_i32_14 : i32
    %18 = arith.extui %17 : i1 to i32
    %c0_i32_15 = arith.constant 0 : i32
    %19 = arith.cmpi ne, %18, %c0_i32_15 : i32
    scf.if %19 {
      %c0_16 = arith.constant 0 : index
      %c0_17 = arith.constant 0 : index
      %20 = vector.load %arg7[%c0_16, %c0_17] : memref<16x128xf32, #tpu.memory_space<vmem>>, vector<16x128xf32>
      %c0_18 = arith.constant 0 : index
      %c0_19 = arith.constant 0 : index
      %21 = vector.load %arg6[%c0_18, %c0_19] : memref<1x128xf32, #tpu.memory_space<vmem>>, vector<1x128xf32>
      %22 = vector.broadcast %21 : vector<1x128xf32> to vector<16x128xf32>
      %23 = arith.addf %20, %22 : vector<16x128xf32>
      %c0_20 = arith.constant 0 : index
      %c0_21 = arith.constant 0 : index
      %24 = vector.load %arg7[%c0_20, %c0_21] : memref<16x128xf32, #tpu.memory_space<vmem>>, vector<16x128xf32>
      tpu.vector_store %arg7[%c0_20, %c0_21], %23 {strides = array<i32>} : memref<16x128xf32, #tpu.memory_space<vmem>>, vector<16x128xf32>,
    } else {
    }
    return
  }
  func.func @transform_0(%arg0: i32, %arg1: i32) -> (i32, i32) {
    %c0_i32 = arith.constant 0 : i32
    %c0_i32_0 = arith.constant 0 : i32
    return %arg0, %c0_i32 : i32, i32
  }
  func.func @transform_1(%arg0: i32, %arg1: i32) -> (i32, i32) {
    %c0_i32 = arith.constant 0 : i32
    %c0_i32_0 = arith.constant 0 : i32
    return %c0_i32, %arg1 : i32, i32
  }
  func.func @transform_2(%arg0: i32, %arg1: i32) -> (i32, i32) {
    %c0_i32 = arith.constant 0 : i32
    %c0_i32_0 = arith.constant 0 : i32
    return %c0_i32, %arg1 : i32, i32
  }
  func.func @transform_3(%arg0: i32, %arg1: i32) -> (i32, i32) {
    %c0_i32 = arith.constant 0 : i32
    %c0_i32_0 = arith.constant 0 : i32
    return %arg1, %c0_i32 : i32, i32
  }
  func.func @transform_4(%arg0: i32, %arg1: i32) -> (i32, i32) {
    %c0_i32 = arith.constant 0 : i32
    %c0_i32_0 = arith.constant 0 : i32
    %c0_i32_1 = arith.constant 0 : i32
    return %c0_i32, %c0_i32_0 : i32, i32
  }
  func.func @transform_5(%arg0: i32, %arg1: i32) -> (i32, i32) {
    %c0_i32 = arith.constant 0 : i32
    %c0_i32_0 = arith.constant 0 : i32
    return %arg0, %c0_i32 : i32, i32
  }
}

</mosaic_0001>

<llo_original>
// kernel: tpu_custom_call.1
$region0: #{tpu_custom_call.1}
  #allocation0 [shape = 'u32[]', space=smem, size = 0x4, offset = 0x4, fixed_abs, tag = 'smem constant byte address 0x4 - core index']
  #allocation1 [shape = 'u32[144,128]{1,0:T(1,128)}', space=vmem, size = 0x12000, scoped, tag = 'internal scratch']
  %s0 = inlined_call_operand.hbm [shape: bf16[16,128], index: 0, kind: input, shape index: {}]
  %s1 = inlined_call_operand.hbm [shape: bf16[128,128], index: 1, kind: input, shape index: {}]
  %s2 = inlined_call_operand.vmem [shape: f32[1,128], index: 2, kind: input, shape index: {}]
  %s3 = inlined_call_operand.hbm [shape: bf16[128,128], index: 3, kind: input, shape index: {}]
  %s4 = inlined_call_operand.vmem [shape: f32[1,128], index: 4, kind: input, shape index: {}]
  %s5 = inlined_call_operand.hbm [shape: f32[16,128], index: 5, kind: output, shape index: {}]
  %s6 = sld [smem:[#allocation0]]
  $region50: #{tpu_custom_call.1} parent=0
    _
  %s8 = ssub.s32 1, %s6
  %s9 = scalar_select 0, %s8, %s6
  $region1: #{tpu_custom_call.1} parent=0
    #allocation2 [shape = 'u8[4096]{0}', space=vmem, size = 0x1000, scoped, tag = 'input window, operand 0, single buffered']
    #allocation3 [shape = 's32[1]{0}', space=sflag, size = 0x4, scoped, tag = 'scoped memory for tpu_custom_call.1']
    #allocation4 [shape = 's32[1]{0}', space=sflag, size = 0x4, scoped, tag = 'scoped memory for tpu_custom_call.1']
    #allocation5 [shape = 'u8[32768]{0}', space=vmem, size = 0x8000, scoped, tag = 'input window, operand 1, single buffered']
    #allocation6 [shape = 's32[1]{0}', space=sflag, size = 0x4, scoped, tag = 'scoped memory for tpu_custom_call.1']
    #allocation7 [shape = 'u8[32768]{0}', space=vmem, size = 0x8000, scoped, tag = 'input window, operand 3, single buffered']
    #allocation8 [shape = 'u8[8192]{0}', space=vmem, size = 0x2000, scoped, tag = 'output window, operand 0, single buffered']
    %10 = vsyncpa [#allocation3], 0
    %11 = vsyncpa [#allocation6], 0
    %12 = vsyncpa [#allocation4], 0
    // Predicated region
    $region2: #{tpu_custom_call.1} parent=1 // pred_check
      _
    $region3: #{tpu_custom_call.1} parent=1 // pred_check_branch
      %14 = sbr.rel (0) target = $region5
    $region4: #{tpu_custom_call.1} parent=1 // pred_region
      %s16 = ssub.s32 128, 128
      %17 = vsyncadd [#allocation3], %s16
      %s18 = sshll.u32 [#allocation2], 4
      %s19 = int_to_ptr.vmem [resolvable:$true] %s18
      %24 = dma.hbm_to_vmem [thread:$0]  %s0, 128, %s19, [#allocation3], 64, 64, 4
    $region5: #{tpu_custom_call.1} parent=1 // pred_fallthru
      _
    // Predicated region
    $region6: #{tpu_custom_call.1} parent=1 // pred_check
      _
    $region7: #{tpu_custom_call.1} parent=1 // pred_check_branch
      %26 = sbr.rel (0) target = $region9
    $region8: #{tpu_custom_call.1} parent=1 // pred_region
      %s28 = ssub.s32 1024, 1024
      %29 = vsyncadd [#allocation6], %s28
      %s30 = sshll.u32 [#allocation5], 4
      %s31 = int_to_ptr.vmem [resolvable:$true] %s30
      %36 = dma.hbm_to_vmem [thread:$0]  %s1, 1024, %s31, [#allocation6], 64, 64, 4
    $region9: #{tpu_custom_call.1} parent=1 // pred_fallthru
      _
    // Predicated region
    $region10: #{tpu_custom_call.1} parent=1 // pred_check
      _
    $region11: #{tpu_custom_call.1} parent=1 // pred_check_branch
      %38 = sbr.rel (0) target = $region13
    $region12: #{tpu_custom_call.1} parent=1 // pred_region
      _
    $region13: #{tpu_custom_call.1} parent=1 // pred_fallthru
      _
    // Predicated region
    $region14: #{tpu_custom_call.1} parent=1 // pred_check
      _
    $region15: #{tpu_custom_call.1} parent=1 // pred_check_branch
      %40 = sbr.rel (0) target = $region17
    $region16: #{tpu_custom_call.1} parent=1 // pred_region
      %s42 = ssub.s32 1024, 1024
      %43 = vsyncadd [#allocation6], %s42
      %s44 = sshll.u32 [#allocation7], 4
      %s45 = int_to_ptr.vmem [resolvable:$true] %s44
      %50 = dma.hbm_to_vmem [thread:$0]  %s3, 1024, %s45, [#allocation6], 64, 64, 4
    $region17: #{tpu_custom_call.1} parent=1 // pred_fallthru
      _
    // Predicated region
    $region18: #{tpu_custom_call.1} parent=1 // pred_check
      _
    $region19: #{tpu_custom_call.1} parent=1 // pred_check_branch
      %52 = sbr.rel (0) target = $region21
    $region20: #{tpu_custom_call.1} parent=1 // pred_region
      _
    $region21: #{tpu_custom_call.1} parent=1 // pred_fallthru
      _
    // Predicated region
    $region22: #{tpu_custom_call.1} parent=1 // pred_check
      _
    $region23: #{tpu_custom_call.1} parent=1 // pred_check_branch
      %54 = sbr.rel (0) target = $region25
    $region24: #{tpu_custom_call.1} parent=1 // pred_region
      %55 = dma.done [#allocation3], 128
    $region25: #{tpu_custom_call.1} parent=1 // pred_fallthru
      _
    // Predicated region
    $region26: #{tpu_custom_call.1} parent=1 // pred_check
      _
    $region27: #{tpu_custom_call.1} parent=1 // pred_check_branch
      %57 = sbr.rel (0) target = $region29
    $region28: #{tpu_custom_call.1} parent=1 // pred_region
      %58 = dma.done [#allocation6], 1024
    $region29: #{tpu_custom_call.1} parent=1 // pred_fallthru
      _
    // Predicated region
    $region30: #{tpu_custom_call.1} parent=1 // pred_check
      _
    $region31: #{tpu_custom_call.1} parent=1 // pred_check_branch
      %60 = sbr.rel (0) target = $region33
    $region32: #{tpu_custom_call.1} parent=1 // pred_region
      %61 = dma.done [#allocation6], 1024
    $region33: #{tpu_custom_call.1} parent=1 // pred_fallthru
      _
    %p63 = scmp.eq.s32.totalorder 0, 0
    // Predicated region
    $region34: #{tpu_custom_call.1} parent=1 // pred_check
      %p64 = pneg %p63
    $region35: #{tpu_custom_call.1} parent=1 // pred_check_branch
      %66 = sbr.rel (%p64) target = $region37
    $region36: #{tpu_custom_call.1} parent=1 // pred_region
      %67 = vst [vmem:[#allocation8] sm:$0xff] 0.0
      %68 = vst [vmem:[#allocation8 + $0x8] sm:$0xff] 0.0
    $region37: #{tpu_custom_call.1} parent=1 // pred_fallthru
      _
    %v69 = vld [vmem:[#allocation2] sm:$0xf]
    %v70 = vld [vmem:[#allocation2 + $0x4] sm:$0xf]
    %v71 = vld [vmem:[#allocation5] sm:$0xf]
    %v72 = vld [vmem:[#allocation5 + $0x4] sm:$0xf]
    %v73 = vld [vmem:[#allocation5 + $0x8] sm:$0xf]
    %v74 = vld [vmem:[#allocation5 + $0xc] sm:$0xf]
    %v75 = vld [vmem:[#allocation5 + $0x10] sm:$0xf]
    %v76 = vld [vmem:[#allocation5 + $0x14] sm:$0xf]
    %v77 = vld [vmem:[#allocation5 + $0x18] sm:$0xf]
    %v78 = vld [vmem:[#allocation5 + $0x1c] sm:$0xf]
    %v79 = vld [vmem:[#allocation5 + $0x20] sm:$0xf]
    %v80 = vld [vmem:[#allocation5 + $0x24] sm:$0xf]
    %v81 = vld [vmem:[#allocation5 + $0x28] sm:$0xf]
    %v82 = vld [vmem:[#allocation5 + $0x2c] sm:$0xf]
    %v83 = vld [vmem:[#allocation5 + $0x30] sm:$0xf]
    %v84 = vld [vmem:[#allocation5 + $0x34] sm:$0xf]
    %v85 = vld [vmem:[#allocation5 + $0x38] sm:$0xf]
    %v86 = vld [vmem:[#allocation5 + $0x3c] sm:$0xf]
    %v87 = vld [vmem:[%s2] sm:$0x1]
    %v89 = vlaneseq
    %v90 = vshrl.u32 %v89, 7
    %v91 = vsub.s32 0, %v90
    %v92 = vrot.slane %v87, %v91
    %v96 = vunpack.c.l.b16 %v69
    %v97 = vunpack.c.l.b16 %v70
    %v98 = vpack.c.b16 %v97, %v96
    %v116 = vunpack.c.l.b16 %v71
    %v117 = vunpack.c.l.b16 %v72
    %v118 = vunpack.c.l.b16 %v73
    %v119 = vunpack.c.l.b16 %v74
    %v120 = vunpack.c.l.b16 %v75
    %v121 = vunpack.c.l.b16 %v76
    %v122 = vunpack.c.l.b16 %v77
    %v123 = vunpack.c.l.b16 %v78
    %v124 = vunpack.c.l.b16 %v79
    %v125 = vunpack.c.l.b16 %v80
    %v126 = vunpack.c.l.b16 %v81
    %v127 = vunpack.c.l.b16 %v82
    %v128 = vunpack.c.l.b16 %v83
    %v129 = vunpack.c.l.b16 %v84
    %v130 = vunpack.c.l.b16 %v85
    %v131 = vunpack.c.l.b16 %v86
    %v132 = vpack.c.b16 %v117, %v116
    %v133 = vpack.c.b16 %v119, %v118
    %v134 = vpack.c.b16 %v121, %v120
    %v135 = vpack.c.b16 %v123, %v122
    %v136 = vpack.c.b16 %v125, %v124
    %v137 = vpack.c.b16 %v127, %v126
    %v138 = vpack.c.b16 %v129, %v128
    %v139 = vpack.c.b16 %v131, %v130
    %148 = vmatprep.subr.bf16.mxu0 0
    %149 = vmatpush1.bf16.msra.mxu0 %v132
    %150 = vmatprep.subr.bf16.mxu0 0
    %151 = vmatpush1.bf16.msra.mxu0 %v133
    %152 = vmatprep.subr.bf16.mxu0 0
    %153 = vmatpush1.bf16.msra.mxu0 %v134
    %154 = vmatprep.subr.bf16.mxu0 0
    %155 = vmatpush1.bf16.msra.mxu0 %v135
    %156 = vmatprep.subr.bf16.mxu0 0
    %157 = vmatpush1.bf16.msra.mxu0 %v136
    %158 = vmatprep.subr.bf16.mxu0 0
    %159 = vmatpush1.bf16.msra.mxu0 %v137
    %160 = vmatprep.subr.bf16.mxu0 0
    %161 = vmatpush1.bf16.msra.mxu0 %v138
    %162 = vmatprep.subr.bf16.mxu0 0
    %163 = vmatpush1.bf16.msra.mxu0 %v139
    %164 = vmatprep.subr.bf16.mxu0 0
    %165 = vmatpush1.bf16.msra.mxu0 0
    %166 = vmatprep.subr.bf16.mxu0 0
    %167 = vmatpush1.bf16.msra.mxu0 0
    %168 = vmatprep.subr.bf16.mxu0 0
    %169 = vmatpush1.bf16.msra.mxu0 0
    %170 = vmatprep.subr.bf16.mxu0 0
    %171 = vmatpush1.bf16.msra.mxu0 0
    %172 = vmatprep.subr.bf16.mxu0 0
    %173 = vmatpush1.bf16.msra.mxu0 0
    %174 = vmatprep.subr.bf16.mxu0 0
    %175 = vmatpush1.bf16.msra.mxu0 0
    %176 = vmatprep.subr.bf16.mxu0 0
    %177 = vmatpush1.bf16.msra.mxu0 0
    %178 = vmatprep.subr.bf16.mxu0 0
    %179 = vmatpush1.bf16.msra.mxu0 0
    %180 = vmatprep.mubr.bf16.mxu0 0
    %181 = vmatmul.mubr.bf16.gmra.mrb[0].mxu0 %v98
    %v182 = vpop.f32.mrb[0].mxu0
    %v183 = vadd.f32 %v92, %v182
    %v184 = vpop.f32.mrb[0].mxu0
    %v185 = vpop.f32.mrb[0].mxu0
    %v186 = vadd.f32 %v92, %v185
    %v187 = vpop.f32.mrb[0].mxu0
    %188 = vdwg.mxu0
    %v189 = vmax.f32 %v183, 0.0
    %v190 = vmax.f32 %v186, 0.0
    %v191 = vld [vmem:[#allocation8] sm:$0xff]
    %v192 = vld [vmem:[#allocation8 + $0x8] sm:$0xff]
    %v193 = vpack.c.bf16 %v190, %v189
    %v194 = vld [vmem:[#allocation7] sm:$0xf]
    %v195 = vld [vmem:[#allocation7 + $0x4] sm:$0xf]
    %v196 = vld [vmem:[#allocation7 + $0x8] sm:$0xf]
    %v197 = vld [vmem:[#allocation7 + $0xc] sm:$0xf]
    %v198 = vld [vmem:[#allocation7 + $0x10] sm:$0xf]
    %v199 = vld [vmem:[#allocation7 + $0x14] sm:$0xf]
    %v200 = vld [vmem:[#allocation7 + $0x18] sm:$0xf]
    %v201 = vld [vmem:[#allocation7 + $0x1c] sm:$0xf]
    %v202 = vld [vmem:[#allocation7 + $0x20] sm:$0xf]
    %v203 = vld [vmem:[#allocation7 + $0x24] sm:$0xf]
    %v204 = vld [vmem:[#allocation7 + $0x28] sm:$0xf]
    %v205 = vld [vmem:[#allocation7 + $0x2c] sm:$0xf]
    %v206 = vld [vmem:[#allocation7 + $0x30] sm:$0xf]
    %v207 = vld [vmem:[#allocation7 + $0x34] sm:$0xf]
    %v208 = vld [vmem:[#allocation7 + $0x38] sm:$0xf]
    %v209 = vld [vmem:[#allocation7 + $0x3c] sm:$0xf]
    %v226 = vunpack.c.l.b16 %v194
    %v227 = vunpack.c.l.b16 %v195
    %v228 = vunpack.c.l.b16 %v196
    %v229 = vunpack.c.l.b16 %v197
    %v230 = vunpack.c.l.b16 %v198
    %v231 = vunpack.c.l.b16 %v199
    %v232 = vunpack.c.l.b16 %v200
    %v233 = vunpack.c.l.b16 %v201
    %v234 = vunpack.c.l.b16 %v202
    %v235 = vunpack.c.l.b16 %v203
    %v236 = vunpack.c.l.b16 %v204
    %v237 = vunpack.c.l.b16 %v205
    %v238 = vunpack.c.l.b16 %v206
    %v239 = vunpack.c.l.b16 %v207
    %v240 = vunpack.c.l.b16 %v208
    %v241 = vunpack.c.l.b16 %v209
    %v242 = vpack.c.b16 %v227, %v226
    %v243 = vpack.c.b16 %v229, %v228
    %v244 = vpack.c.b16 %v231, %v230
    %v245 = vpack.c.b16 %v233, %v232
    %v246 = vpack.c.b16 %v235, %v234
    %v247 = vpack.c.b16 %v237, %v236
    %v248 = vpack.c.b16 %v239, %v238
    %v249 = vpack.c.b16 %v241, %v240
    %258 = vmatprep.subr.bf16.mxu0 0
    %259 = vmatpush1.bf16.msra.mxu0 %v242
    %260 = vmatprep.subr.bf16.mxu0 0
    %261 = vmatpush1.bf16.msra.mxu0 %v243
    %262 = vmatprep.subr.bf16.mxu0 0
    %263 = vmatpush1.bf16.msra.mxu0 %v244
    %264 = vmatprep.subr.bf16.mxu0 0
    %265 = vmatpush1.bf16.msra.mxu0 %v245
    %266 = vmatprep.subr.bf16.mxu0 0
    %267 = vmatpush1.bf16.msra.mxu0 %v246
    %268 = vmatprep.subr.bf16.mxu0 0
    %269 = vmatpush1.bf16.msra.mxu0 %v247
    %270 = vmatprep.subr.bf16.mxu0 0
    %271 = vmatpush1.bf16.msra.mxu0 %v248
    %272 = vmatprep.subr.bf16.mxu0 0
    %273 = vmatpush1.bf16.msra.mxu0 %v249
    %274 = vmatprep.subr.bf16.mxu0 0
    %275 = vmatpush1.bf16.msra.mxu0 0
    %276 = vmatprep.subr.bf16.mxu0 0
    %277 = vmatpush1.bf16.msra.mxu0 0
    %278 = vmatprep.subr.bf16.mxu0 0
    %279 = vmatpush1.bf16.msra.mxu0 0
    %280 = vmatprep.subr.bf16.mxu0 0
    %281 = vmatpush1.bf16.msra.mxu0 0
    %282 = vmatprep.subr.bf16.mxu0 0
    %283 = vmatpush1.bf16.msra.mxu0 0
    %284 = vmatprep.subr.bf16.mxu0 0
    %285 = vmatpush1.bf16.msra.mxu0 0
    %286 = vmatprep.subr.bf16.mxu0 0
    %287 = vmatpush1.bf16.msra.mxu0 0
    %288 = vmatprep.subr.bf16.mxu0 0
    %289 = vmatpush1.bf16.msra.mxu0 0
    %290 = vmatprep.mubr.bf16.mxu0 0
    %291 = vmatmul.mubr.bf16.gmra.mrb[0].mxu0 %v193
    %v292 = vpop.f32.mrb[0].mxu0
    %v293 = vadd.f32 0.0, %v292
    %v294 = vpop.f32.mrb[0].mxu0
    %v295 = vpop.f32.mrb[0].mxu0
    %v296 = vadd.f32 0.0, %v295
    %v297 = vpop.f32.mrb[0].mxu0
    %298 = vdwg.mxu0
    %v299 = vadd.f32 %v191, %v293
    %v300 = vadd.f32 %v192, %v296
    %301 = vst [vmem:[#allocation8] sm:$0xff] %v299
    %302 = vst [vmem:[#allocation8 + $0x8] sm:$0xff] %v300
    // Predicated region
    $region38: #{tpu_custom_call.1} parent=1 // pred_check
      %p303 = pneg %p63
    $region39: #{tpu_custom_call.1} parent=1 // pred_check_branch
      %305 = sbr.rel (%p303) target = $region41
    $region40: #{tpu_custom_call.1} parent=1 // pred_region
      %v306 = vld [vmem:[#allocation8] sm:$0xff]
      %v307 = vld [vmem:[#allocation8 + $0x8] sm:$0xff]
      %v308 = vld [vmem:[%s4] sm:$0x1]
      %v310 = vlaneseq
      %v311 = vshrl.u32 %v310, 7
      %v312 = vsub.s32 0, %v311
      %v313 = vrot.slane %v308, %v312
      %v315 = vadd.f32 %v306, %v313
      %v316 = vadd.f32 %v307, %v313
      %317 = vst [vmem:[#allocation8] sm:$0xff] %v315
      %318 = vst [vmem:[#allocation8 + $0x8] sm:$0xff] %v316
    $region41: #{tpu_custom_call.1} parent=1 // pred_fallthru
      _
    // Predicated region
    $region42: #{tpu_custom_call.1} parent=1 // pred_check
      _
    $region43: #{tpu_custom_call.1} parent=1 // pred_check_branch
      %320 = sbr.rel (0) target = $region45
    $region44: #{tpu_custom_call.1} parent=1 // pred_region
      %s322 = ssub.s32 256, 256
      %323 = vsyncadd [#allocation4], %s322
      %s324 = sshll.u32 [#allocation8], 4
      %s325 = int_to_ptr.vmem [resolvable:$true] %s324
      %330 = dma.vmem_to_hbm [thread:$0]  %s325, 256, %s5, [#allocation4], 128, 128, 8
    $region45: #{tpu_custom_call.1} parent=1 // pred_fallthru
      _
    // Predicated region
    $region46: #{tpu_custom_call.1} parent=1 // pred_check
      _
    $region47: #{tpu_custom_call.1} parent=1 // pred_check_branch
      %332 = sbr.rel (0) target = $region49
    $region48: #{tpu_custom_call.1} parent=1 // pred_region
      %333 = dma.done [#allocation4], 256
    $region49: #{tpu_custom_call.1} parent=1 // pred_fallthru
      _
    %334 = vsyncpa [#allocation3], 1
    %335 = vsyncpa [#allocation6], 1
    %336 = vsyncpa [#allocation4], 1

</llo_original>
